<compile_context>
chip_gen: v6e
topology: v6e:2x2x1
jax: 0.10.0
libtpu: 0.0.40
codegen_flags: <defaults>
</compile_context>

<pallas_src>
import jax
import jax.numpy as jnp
from jax.experimental import pallas as pl
from jax.experimental.pallas import tpu as pltpu


def _round_up(n: int, m: int) -> int:
    return ((n + m - 1) // m) * m


def _hypernet_kernel(x_ref, w_ref, o_ref):
    # x_ref: (B, L) VMEM tile, resident across grid steps.
    # w_ref: (L, tn) K-major weight tile -> direct MXU feed, no XLU transpose.
    # o_ref: (B, tn) output tile (lane-dense except possibly the last tile).
    o_ref[...] = jnp.dot(
        x_ref[...], w_ref[...], preferred_element_type=jnp.float32
    ).astype(o_ref.dtype)


def prepare_hypernet_weight(weight: jax.Array, compute_dtype=jnp.bfloat16) -> jax.Array:
    """One-time weight preprocessing (call at init, NOT per forward).

    weight: [output_size, latent_size]  (torch.nn.Linear layout)
    compute_dtype: dtype the MXU consumes (default bf16 -> half the HBM bytes
                   for the streamed weight; pass None to keep exact f32).
    returns K-major weight [latent_size, output_size].
    """
    w_t = weight.T
    if compute_dtype is not None:
        w_t = w_t.astype(compute_dtype)
    return w_t


def hypernet_forward(x: jax.Array,
                     w_kmajor: jax.Array,
                     *,
                     tn: int = 16384,
                     vmem_budget_bytes: int = 40 * 1024 * 1024) -> jax.Array:
    """Pallas implementation of HyperNet.forward (out = x @ W.T).

    x:        [batch, latent_size]
    w_kmajor: [latent_size, output_size] from prepare_hypernet_weight()
    tn:       requested output tile width (rounded to a multiple of 128 and
              clamped by output_size and the VMEM budget)
    returns   [batch, output_size] in x's dtype (f32 accumulation inside).
    """
    batch, latent = x.shape
    latent_w, output_size = w_kmajor.shape
    assert latent == latent_w, "latent_size mismatch"

    out_dtype = x.dtype
    # Keep x and W in the same (compute) dtype so the MXU consumes both
    # directly; x is tiny so this cast is negligible. Accumulation stays f32.
    if x.dtype != w_kmajor.dtype:
        x = x.astype(w_kmajor.dtype)

    w_itemsize = jnp.dtype(w_kmajor.dtype).itemsize
    x_itemsize = jnp.dtype(x.dtype).itemsize
    out_itemsize = jnp.dtype(out_dtype).itemsize

    # --- Tile-width selection ------------------------------------------------
    n128 = _round_up(output_size, 128)
    tn = max(128, min(_round_up(tn, 128), n128))

    # Clamp working set under the VMEM budget (double-buffered W and out tiles
    # plus the resident x). Budget default (40 MiB) + headroom fits v7x's
    # 64 MiB per-TC VMEM and is comfortably under v5e/v6e's 128 MiB.
    per_col_bytes = 2 * latent * w_itemsize + 2 * batch * out_itemsize
    fixed_bytes = batch * latent * x_itemsize
    max_tn = (vmem_budget_bytes - fixed_bytes) // max(per_col_bytes, 1)
    max_tn = max(128, (max_tn // 128) * 128)
    tn = min(tn, max_tn)

    # v7x megacore: if one huge tile would cover everything, split it in two so
    # both TensorCores get balanced work.
    if pl.cdiv(output_size, tn) == 1 and output_size > 4096:
        tn = max(128, _round_up(pl.cdiv(output_size, 2), 128))

    n_tiles = pl.cdiv(output_size, tn)

    working_set = per_col_bytes * tn + fixed_bytes
    vmem_limit = int(min(max(working_set + (8 << 20), 32 << 20), 60 << 20))

    cost = pl.CostEstimate(
        flops=2 * batch * latent * output_size,
        transcendentals=0,
        bytes_accessed=int(x.size * x_itemsize
                           + w_kmajor.size * w_itemsize
                           + batch * output_size * out_itemsize),
    )

    return pl.pallas_call(
        _hypernet_kernel,
        out_shape=jax.ShapeDtypeStruct((batch, output_size), out_dtype),
        grid=(n_tiles,),
        in_specs=[
            # x is small and reused by every output tile: full-array block.
            pl.BlockSpec((batch, latent), lambda j: (0, 0)),
            # Weight streamed tile-by-tile over the output dim, double-buffered
            # by the Pallas pipeline (multi-MiB tiles -> DMA hidden under MXU).
            pl.BlockSpec((latent, tn), lambda j: (0, j)),
        ],
        out_specs=pl.BlockSpec((batch, tn), lambda j: (0, j)),
        compiler_params=pltpu.CompilerParams(
            dimension_semantics=("parallel",),
            vmem_limit_bytes=vmem_limit,
        ),
        cost_estimate=cost,
    )(x, w_kmajor)


if __name__ == "__main__":
    # Small shapes consistent with the module: latent_size=32, output_size=64.
    batch = 8
    latent_size = 32
    output_size = 64

    key = jax.random.PRNGKey(0)
    kx, kw = jax.random.split(key)

    x = jax.random.normal(kx, (batch, latent_size), dtype=jnp.float32)
    # Deterministic init matching nn.Linear's U(-1/sqrt(fan_in), 1/sqrt(fan_in)) range.
    bound = 1.0 / jnp.sqrt(jnp.float32(latent_size))
    weight = jax.random.uniform(
        kw, (output_size, latent_size), dtype=jnp.float32,
        minval=-bound, maxval=bound,
    )

    ref = x @ weight.T  # plain-JAX reference (out = x @ W.T)

    # Default path: bf16 weight/compute (weight preprocessed ONCE at init).
    w_bf16 = prepare_hypernet_weight(weight)
    out = jax.block_until_ready(hypernet_forward(x, w_bf16))
    assert out.shape == (batch, output_size)
    assert out.dtype == x.dtype
    assert jnp.allclose(out, ref, atol=5e-2, rtol=5e-2), "bf16 path mismatch"

    # Exact f32 path; output_size=64 < tn=128 also exercises the partial
    # (unpadded) last tile handling.
    w_f32 = prepare_hypernet_weight(weight, compute_dtype=None)
    out_f32 = jax.block_until_ready(hypernet_forward(x, w_f32, tn=128))
    assert jnp.allclose(out_f32, ref, atol=1e-5, rtol=1e-5), "f32 path mismatch"

    print("KERNEL_OK")
</pallas_src>

<mosaic_0001>
module attributes {stable_mosaic.version = 11 : i64} {
  func.func @_hypernet_kernel(%arg0: i32, %arg1: memref<8x32xbf16, #tpu.memory_space<vmem>>, %arg2: memref<32x128xbf16, #tpu.memory_space<vmem>>, %arg3: memref<8x128xf32, #tpu.memory_space<vmem>>) attributes {dimension_semantics = [#tpu.dimension_semantics<parallel>], iteration_bounds = array<i64: 1>, scalar_prefetch = 0 : i64, scratch_operands = 0 : i64, tpu.core_type = #tpu.core_type<tc>, window_params = [{pipeline_mode = #tpu.pipeline_mode<synchronous>, transform_indices = @transform_0, window_bounds = array<i64: 8, 32>}, {transform_indices = @transform_1, window_bounds = array<i64: 32, 128>}, {transform_indices = @transform_2, window_bounds = array<i64: 8, 128>}]} {
    %c0 = arith.constant 0 : index
    %c0_0 = arith.constant 0 : index
    %0 = vector.load %arg1[%c0, %c0_0] : memref<8x32xbf16, #tpu.memory_space<vmem>>, vector<8x32xbf16>
    %c0_1 = arith.constant 0 : index
    %c0_2 = arith.constant 0 : index
    %1 = vector.load %arg2[%c0_1, %c0_2] : memref<32x128xbf16, #tpu.memory_space<vmem>>, vector<32x128xbf16>
    %cst = arith.constant dense<0.000000e+00> : vector<8x128xf32>
    %2 = tpu.matmul %0, %1, %cst {dimension_numbers = #tpu.dot_dimension_numbers<[1], [0], [0], [1], [0, 0, 1, 1], [], []>} : vector<8x32xbf16>, vector<32x128xbf16>, vector<8x128xf32> -> vector<8x128xf32>
    %c0_3 = arith.constant 0 : index
    %c0_4 = arith.constant 0 : index
    %3 = vector.load %arg3[%c0_3, %c0_4] : memref<8x128xf32, #tpu.memory_space<vmem>>, vector<8x128xf32>
    tpu.vector_store %arg3[%c0_3, %c0_4], %2 {strides = array<i32>} : memref<8x128xf32, #tpu.memory_space<vmem>>, vector<8x128xf32>,
    return
  }
  func.func @transform_0(%arg0: i32) -> (i32, i32) {
    %c0_i32 = arith.constant 0 : i32
    %c0_i32_0 = arith.constant 0 : i32
    %c0_i32_1 = arith.constant 0 : i32
    return %c0_i32, %c0_i32_0 : i32, i32
  }
  func.func @transform_1(%arg0: i32) -> (i32, i32) {
    %c0_i32 = arith.constant 0 : i32
    %c0_i32_0 = arith.constant 0 : i32
    return %c0_i32, %arg0 : i32, i32
  }
  func.func @transform_2(%arg0: i32) -> (i32, i32) {
    %c0_i32 = arith.constant 0 : i32
    %c0_i32_0 = arith.constant 0 : i32
    return %c0_i32, %arg0 : i32, i32
  }
}

</mosaic_0001>

<llo_original>
// kernel: tpu_custom_call.1
$region0: #{tpu_custom_call.1}
  #allocation0 [shape = 'u32[]', space=smem, size = 0x4, offset = 0x4, fixed_abs, tag = 'smem constant byte address 0x4 - core index']
  #allocation1 [shape = 'u32[144,128]{1,0:T(1,128)}', space=vmem, size = 0x12000, scoped, tag = 'internal scratch']
  %s0 = inlined_call_operand.hbm [shape: bf16[8,32], index: 0, kind: input, shape index: {}]
  %s1 = inlined_call_operand.hbm [shape: bf16[32,64], index: 1, kind: input, shape index: {}]
  %s2 = inlined_call_operand.hbm [shape: f32[8,64], index: 2, kind: output, shape index: {}]
  %s3 = sld [smem:[#allocation0]]
  $region26: #{tpu_custom_call.1} parent=0
    _
  %s5 = ssub.s32 1, %s3
  %s6 = scalar_select 0, %s5, %s3
  $region1: #{tpu_custom_call.1} parent=0
    #allocation2 [shape = 'u8[2048]{0}', space=vmem, size = 0x800, scoped, tag = 'input window, operand 0, single buffered']
    #allocation3 [shape = 's32[1]{0}', space=sflag, size = 0x4, scoped, tag = 'scoped memory for tpu_custom_call.1']
    #allocation4 [shape = 's32[1]{0}', space=sflag, size = 0x4, scoped, tag = 'scoped memory for tpu_custom_call.1']
    #allocation5 [shape = 'u8[8192]{0}', space=vmem, size = 0x2000, scoped, tag = 'input window, operand 1, single buffered']
    #allocation6 [shape = 's32[1]{0}', space=sflag, size = 0x4, scoped, tag = 'scoped memory for tpu_custom_call.1']
    #allocation7 [shape = 'u8[4096]{0}', space=vmem, size = 0x1000, scoped, tag = 'output window, operand 0, single buffered']
    %7 = vsyncpa [#allocation3], 0
    %8 = vsyncpa [#allocation6], 0
    %9 = vsyncpa [#allocation4], 0
    // Predicated region
    $region2: #{tpu_custom_call.1} parent=1 // pred_check
      _
    $region3: #{tpu_custom_call.1} parent=1 // pred_check_branch
      %11 = sbr.rel (0) target = $region5
    $region4: #{tpu_custom_call.1} parent=1 // pred_region
      %s13 = ssub.s32 64, 64
      %14 = vsyncadd [#allocation3], %s13
      %s16 = sshll.u32 [#allocation2], 4
      %s17 = int_to_ptr.vmem [resolvable:$true] %s16
      %19 = dma.hbm_to_vmem [thread:$0]  %s0, 64, %s17, [#allocation3]
    $region5: #{tpu_custom_call.1} parent=1 // pred_fallthru
      _
    // Predicated region
    $region6: #{tpu_custom_call.1} parent=1 // pred_check
      _
    $region7: #{tpu_custom_call.1} parent=1 // pred_check_branch
      %21 = sbr.rel (0) target = $region9
    $region8: #{tpu_custom_call.1} parent=1 // pred_region
      %s23 = ssub.s32 256, 256
      %24 = vsyncadd [#allocation6], %s23
      %s25 = sshll.u32 [#allocation5], 4
      %s26 = int_to_ptr.vmem [resolvable:$true] %s25
      %31 = dma.hbm_to_vmem [thread:$0]  %s1, 256, %s26, [#allocation6], 64, 64, 4
    $region9: #{tpu_custom_call.1} parent=1 // pred_fallthru
      _
    // Predicated region
    $region10: #{tpu_custom_call.1} parent=1 // pred_check
      _
    $region11: #{tpu_custom_call.1} parent=1 // pred_check_branch
      %33 = sbr.rel (0) target = $region13
    $region12: #{tpu_custom_call.1} parent=1 // pred_region
      %34 = dma.done [#allocation3], 64
    $region13: #{tpu_custom_call.1} parent=1 // pred_fallthru
      _
    // Predicated region
    $region14: #{tpu_custom_call.1} parent=1 // pred_check
      _
    $region15: #{tpu_custom_call.1} parent=1 // pred_check_branch
      %36 = sbr.rel (0) target = $region17
    $region16: #{tpu_custom_call.1} parent=1 // pred_region
      %37 = dma.done [#allocation6], 256
    $region17: #{tpu_custom_call.1} parent=1 // pred_fallthru
      _
    %v39 = vld [vmem:[#allocation2] sm:$0xf]
    %v40 = vld [vmem:[#allocation5] sm:$0xf]
    %v41 = vld [vmem:[#allocation5 + $0x4] sm:$0xf]
    %v42 = vld [vmem:[#allocation5 + $0x8] sm:$0xf]
    %v43 = vld [vmem:[#allocation5 + $0xc] sm:$0xf]
    %v48 = vunpack.c.l.b16 %v40
    %v49 = vunpack.c.l.b16 %v41
    %v50 = vunpack.c.l.b16 %v42
    %v51 = vunpack.c.l.b16 %v43
    %v52 = vpack.c.b16 %v49, %v48
    %v53 = vpack.c.b16 %v51, %v50
    %vm56 = vcmask 261120
    %v58 = vsel %vm56, %v39, 0
    %60 = vmatprep.subr.bf16.mxu0 0
    %61 = vmatpush1.bf16.msra.mxu0 0
    %62 = vmatprep.subr.bf16.mxu0 0
    %63 = vmatpush1.bf16.msra.mxu0 0
    %64 = vmatprep.subr.bf16.mxu0 0
    %65 = vmatpush1.bf16.msra.mxu0 0
    %66 = vmatprep.subr.bf16.mxu0 0
    %67 = vmatpush1.bf16.msra.mxu0 0
    %68 = vmatprep.subr.bf16.mxu0 0
    %69 = vmatpush1.bf16.msra.mxu0 0
    %70 = vmatprep.subr.bf16.mxu0 0
    %71 = vmatpush1.bf16.msra.mxu0 0
    %72 = vmatprep.subr.bf16.mxu0 0
    %73 = vmatpush1.bf16.msra.mxu0 %v53
    %74 = vmatprep.subr.bf16.mxu0 0
    %75 = vmatpush1.bf16.msra.mxu0 %v52
    %76 = vmatprep.subr.bf16.mxu0 0
    %77 = vmatpush2.bf16.msra.mxu0 0
    %78 = vmatprep.subr.bf16.mxu0 0
    %79 = vmatpush2.bf16.msra.mxu0 0
    %80 = vmatprep.subr.bf16.mxu0 0
    %81 = vmatpush2.bf16.msra.mxu0 0
    %82 = vmatprep.subr.bf16.mxu0 0
    %83 = vmatpush2.bf16.msra.mxu0 0
    %84 = vmatprep.subr.bf16.mxu0 0
    %85 = vmatpush2.bf16.msra.mxu0 0
    %86 = vmatprep.subr.bf16.mxu0 0
    %87 = vmatpush2.bf16.msra.mxu0 0
    %88 = vmatprep.subr.bf16.mxu0 0
    %89 = vmatpush2.bf16.msra.mxu0 0
    %90 = vmatprep.subr.bf16.mxu0 0
    %91 = vmatpush2.bf16.msra.mxu0 0
    %92 = vmatprep.mubr.bf16.mxu0 0
    %93 = vmatmul.mubr.bf16.gmra.mxu0 %v58
    %v94 = vpop.f32.mrf.mxu0
    %v95 = vadd.f32 0.0, %v94
    %v96 = vpop.f32.mrf.mxu0
    %v97 = vpop.f32.mrf.mxu0
    %v98 = vpop.f32.mrf.mxu0
    %99 = vdwg.mxu0
    %100 = vst [vmem:[#allocation7] sm:$0xff] %v95
    // Predicated region
    $region18: #{tpu_custom_call.1} parent=1 // pred_check
      _
    $region19: #{tpu_custom_call.1} parent=1 // pred_check_branch
      %102 = sbr.rel (0) target = $region21
    $region20: #{tpu_custom_call.1} parent=1 // pred_region
      %s104 = ssub.s32 128, 128
      %105 = vsyncadd [#allocation4], %s104
      %s107 = sshll.u32 [#allocation7], 4
      %s108 = int_to_ptr.vmem [resolvable:$true] %s107
      %110 = dma.vmem_to_hbm [thread:$0]  %s108, 128, %s2, [#allocation4]
    $region21: #{tpu_custom_call.1} parent=1 // pred_fallthru
      _
    // Predicated region
    $region22: #{tpu_custom_call.1} parent=1 // pred_check
      _
    $region23: #{tpu_custom_call.1} parent=1 // pred_check_branch
      %112 = sbr.rel (0) target = $region25
    $region24: #{tpu_custom_call.1} parent=1 // pred_region
      %113 = dma.done [#allocation4], 128
    $region25: #{tpu_custom_call.1} parent=1 // pred_fallthru
      _
    %114 = vsyncpa [#allocation3], 1
    %115 = vsyncpa [#allocation6], 1
    %116 = vsyncpa [#allocation4], 1

</llo_original>
